<compile_context>
chip_gen: v7x
topology: tpu7x:2x2x1
jax: 0.10.0
libtpu: 0.0.40
codegen_flags: <defaults>
</compile_context>

<pallas_src>
import jax
import jax.numpy as jnp
from jax.experimental import pallas as pl
from jax.experimental.pallas import tpu as pltpu


# ---------------------------------------------------------------------------
# Kernel: sequence-fused bidirectional (single-step-per-token) GRU
# ---------------------------------------------------------------------------
def bigru_seq_kernel(tok_ref,      # SMEM (T,) int32   : scalar-prefetched tokens
                     emb_ref,      # VMEM (V, E)       : resident embedding table
                     w_in_ref,     # VMEM (E, 3P)      : fused input->gate weights
                     b_in_ref,     # VMEM (1, 3P)      : fused input-side biases
                     w_hh_ref,     # VMEM (P, 3P)      : fused hidden->gate weights
                     b_hn_ref,     # VMEM (1, 3P)      : hidden-side n-gate bias
                     h0_ref,       # VMEM (1, P)       : initial hidden [fwd|bwd|pad]
                     out_ref,      # VMEM (T, P)       : per-step hidden (resident)
                     x_sc,         # VMEM (T, E)  scratch: gathered embedding rows
                     gi_sc,        # VMEM (T, 3P) scratch: hoisted input projections
                     h_sc):        # VMEM (1, P)  scratch: carried hidden state
    t = pl.program_id(0)
    T = out_ref.shape[0]
    P = h0_ref.shape[-1]                     # padded gate-group width (128)

    # ---- one-time prologue (t == 0): gather + batched input projection -----
    @pl.when(t == 0)
    def _():
        h_sc[...] = h0_ref[...]
        # Gather the T embedding rows from the VMEM-resident table
        # (T is small & static here; for long sequences switch to lax.fori_loop).
        for i in range(T):
            x_sc[pl.ds(i, 1), :] = emb_ref[pl.ds(tok_ref[i], 1), :]
        # Hoisted input projection: ONE batched (T, E) x (E, 3P) MXU matmul.
        gi_sc[...] = (
            jnp.dot(x_sc[...], w_in_ref[...], preferred_element_type=jnp.float32)
            + b_in_ref[...])

    # ---- per-step recurrence (only h @ W_hh stays inside the loop) ---------
    h = h_sc[...]                                          # (1, P)
    gi = gi_sc[pl.ds(t, 1), :]                             # (1, 3P) this step
    gh = (jnp.dot(h, w_hh_ref[...], preferred_element_type=jnp.float32)
          + b_hn_ref[...])                                 # (1, 3P)

    # Gate groups are 128-lane aligned -> whole-vreg slices, no lane rotates.
    r = jax.nn.sigmoid(gi[:, 0 * P:1 * P] + gh[:, 0 * P:1 * P])
    z = jax.nn.sigmoid(gi[:, 1 * P:2 * P] + gh[:, 1 * P:2 * P])
    n = jnp.tanh(gi[:, 2 * P:3 * P] + r * gh[:, 2 * P:3 * P])
    h_new = (1.0 - z) * n + z * h                          # (1, P); pad lanes stay 0

    h_sc[...] = h_new
    out_ref[pl.ds(t, 1), :] = h_new


# ---------------------------------------------------------------------------
# Wrappers
# ---------------------------------------------------------------------------
def encoder_rnn_sequence(tokens, hidden0, fused):
    """Run EncoderRNN.forward for every token of `tokens`, threading the hidden.

    tokens : int32 (T,)
    hidden0: float32 (2, 1, H)
    fused  : dict with "embedding" (V,E), "w_in" (E,3P), "b_in" (1,3P),
             "w_hh" (P,3P), "b_hn" (1,3P)
    returns outputs (T, 1, 2H) and hidden (2, 1, H).
    """
    emb = fused["embedding"]
    w_in, b_in = fused["w_in"], fused["b_in"]
    w_hh, b_hn = fused["w_hh"], fused["b_hn"]

    V, E = emb.shape
    H = hidden0.shape[-1]
    P = w_hh.shape[0]
    T = tokens.shape[0]

    # PyTorch raises IndexError for out-of-range tokens; we clamp instead.
    toks = jnp.clip(tokens.astype(jnp.int32), 0, V - 1)
    h0 = jnp.zeros((1, P), jnp.float32).at[:, :2 * H].set(
        hidden0.astype(jnp.float32).reshape(1, 2 * H))

    grid_spec = pltpu.PrefetchScalarGridSpec(
        num_scalar_prefetch=1,
        grid=(T,),
        in_specs=[
            pl.BlockSpec((V, E), lambda t, toks: (0, 0)),        # emb   (resident)
            pl.BlockSpec((E, 3 * P), lambda t, toks: (0, 0)),    # w_in  (resident)
            pl.BlockSpec((1, 3 * P), lambda t, toks: (0, 0)),    # b_in
            pl.BlockSpec((P, 3 * P), lambda t, toks: (0, 0)),    # w_hh  (resident)
            pl.BlockSpec((1, 3 * P), lambda t, toks: (0, 0)),    # b_hn
            pl.BlockSpec((1, P), lambda t, toks: (0, 0)),        # h0
        ],
        out_specs=pl.BlockSpec((T, P), lambda t, toks: (0, 0)),  # resident slab
        scratch_shapes=[
            pltpu.VMEM((T, E), jnp.float32),       # gathered embeddings
            pltpu.VMEM((T, 3 * P), jnp.float32),   # hoisted input projections
            pltpu.VMEM((1, P), jnp.float32),       # carried hidden state
        ],
    )

    out = pl.pallas_call(
        bigru_seq_kernel,
        out_shape=jax.ShapeDtypeStruct((T, P), jnp.float32),
        grid_spec=grid_spec,
        compiler_params=pltpu.CompilerParams(
            dimension_semantics=("arbitrary",)),   # sequential recurrence
    )(toks, emb, w_in, b_in, w_hh, b_hn, h0)

    outputs = out[:, :2 * H].reshape(T, 1, 2 * H)
    hidden_new = out[T - 1, :2 * H].reshape(2, 1, H)
    return outputs, hidden_new


encoder_rnn_sequence_jit = jax.jit(encoder_rnn_sequence)


def encoder_rnn_forward(token, hidden, fused):
    """Exact equivalent of one EncoderRNN.forward(input, hidden) call."""
    outputs, hidden_new = encoder_rnn_sequence_jit(token.reshape(1), hidden, fused)
    return outputs.reshape(1, 1, -1), hidden_new


# ---------------------------------------------------------------------------
# Parameter preparation (fold both directions into padded fused gate blocks)
# ---------------------------------------------------------------------------
def build_fused_gru_weights(wihT, whhT, bih, bhh):
    """wihT (2,E,3H), whhT (2,H,3H), bih/bhh (2,3H) ->
       w_in (E,3P), b_in (1,3P), w_hh (P,3P), b_hn (1,3P), with P = 128-padded 2H.

    Gate-group layout along the 3P columns: [ r | z | n ], each group P lanes,
    first 2H lanes = [fwd | bwd], rest zero.  r/z biases are pre-folded into
    b_in; the n-gate hidden bias stays in b_hn so the kernel can apply
    r * (W_hn h + b_hn) exactly like torch.nn.GRU.
    """
    _, E, _ = wihT.shape
    H = whhT.shape[1]
    P = max(128, ((2 * H + 127) // 128) * 128)

    w_in = jnp.zeros((E, 3 * P), jnp.float32)
    b_in = jnp.zeros((1, 3 * P), jnp.float32)
    w_hh = jnp.zeros((P, 3 * P), jnp.float32)
    b_hn = jnp.zeros((1, 3 * P), jnp.float32)

    for d in range(2):
        rows = slice(d * H, (d + 1) * H)             # hidden rows for direction d
        for g in range(3):                           # 0=r, 1=z, 2=n
            cols = slice(g * P + d * H, g * P + (d + 1) * H)
            w_in = w_in.at[:, cols].set(wihT[d][:, g * H:(g + 1) * H])
            w_hh = w_hh.at[rows, cols].set(whhT[d][:, g * H:(g + 1) * H])
            if g < 2:   # r, z: fold both biases into the input-side bias
                b_in = b_in.at[0, cols].set(
                    bih[d, g * H:(g + 1) * H] + bhh[d, g * H:(g + 1) * H])
            else:       # n: keep halves separate (r multiplies the hidden half)
                b_in = b_in.at[0, cols].set(bih[d, g * H:(g + 1) * H])
                b_hn = b_hn.at[0, cols].set(bhh[d, g * H:(g + 1) * H])
    return w_in, b_in, w_hh, b_hn


def init_params(key, input_size, embedding_size, hidden_size):
    """Deterministic parameter init matching nn.Embedding + nn.GRU shapes."""
    kE, kWih, kWhh, kBih, kBhh = jax.random.split(key, 5)
    H, E, G = hidden_size, embedding_size, 3 * hidden_size
    bound = 1.0 / jnp.sqrt(jnp.float32(H))
    embedding = jax.random.normal(kE, (input_size, E), dtype=jnp.float32)   # N(0,1)
    wihT = jax.random.uniform(kWih, (2, E, G), jnp.float32, -bound, bound)  # (in,3H)
    whhT = jax.random.uniform(kWhh, (2, H, G), jnp.float32, -bound, bound)
    bih = jax.random.uniform(kBih, (2, G), jnp.float32, -bound, bound)
    bhh = jax.random.uniform(kBhh, (2, G), jnp.float32, -bound, bound)
    return {"embedding": embedding, "wihT": wihT, "whhT": whhT, "bih": bih, "bhh": bhh}


# ---------------------------------------------------------------------------
# Pure-JAX reference (mirrors torch.nn.GRU, uses the ORIGINAL unfused params)
# ---------------------------------------------------------------------------
def encoder_rnn_reference_step(token, hidden, params):
    emb = params["embedding"]
    H = hidden.shape[-1]
    x = emb[token[0]].reshape(1, -1)
    hs = []
    for d in range(2):
        h = hidden[d]                                            # (1, H)
        gi = x @ params["wihT"][d] + params["bih"][d][None, :]
        gh = h @ params["whhT"][d] + params["bhh"][d][None, :]
        r = jax.nn.sigmoid(gi[:, :H] + gh[:, :H])
        z = jax.nn.sigmoid(gi[:, H:2 * H] + gh[:, H:2 * H])
        n = jnp.tanh(gi[:, 2 * H:] + r * gh[:, 2 * H:])
        hs.append((1.0 - z) * n + z * h)
    h_new = jnp.stack(hs, axis=0)
    outputs = jnp.concatenate([h_new[0], h_new[1]], axis=-1).reshape(1, 1, 2 * H)
    return outputs, h_new


def encoder_rnn_reference_sequence(tokens, hidden, params):
    outs = []
    for i in range(tokens.shape[0]):
        o, hidden = encoder_rnn_reference_step(tokens[i:i + 1], hidden, params)
        outs.append(o[0])
    return jnp.stack(outs, axis=0), hidden


if __name__ == "__main__":
    input_size = 50        # vocab size
    embedding_size = 32
    hidden_size = 32
    seq_len = 8

    key = jax.random.PRNGKey(0)
    kparam, ktok, khid, kseq = jax.random.split(key, 4)

    params = init_params(kparam, input_size, embedding_size, hidden_size)
    w_in, b_in, w_hh, b_hn = build_fused_gru_weights(
        params["wihT"], params["whhT"], params["bih"], params["bhh"])
    fused = {"embedding": params["embedding"],
             "w_in": w_in, "b_in": b_in, "w_hh": w_hh, "b_hn": b_hn}

    # --- single-step forward (the module's exact signature) -----------------
    token = jax.random.randint(ktok, (1,), 0, input_size, dtype=jnp.int32)
    hidden = jax.random.normal(khid, (2, 1, hidden_size), dtype=jnp.float32)

    outputs, hidden_new = encoder_rnn_forward(token, hidden, fused)
    outputs = jax.block_until_ready(outputs)
    hidden_new = jax.block_until_ready(hidden_new)

    ref_out, ref_hid = encoder_rnn_reference_step(token, hidden, params)
    assert outputs.shape == (1, 1, 2 * hidden_size)
    assert hidden_new.shape == (2, 1, hidden_size)
    assert jnp.allclose(outputs, ref_out, atol=2e-4, rtol=2e-4)
    assert jnp.allclose(hidden_new, ref_hid, atol=2e-4, rtol=2e-4)

    # --- sequence-fused forward: T EncoderRNN.forward steps, ONE pallas_call
    tokens = jax.random.randint(kseq, (seq_len,), 0, input_size, dtype=jnp.int32)
    hidden0 = jnp.zeros((2, 1, hidden_size), jnp.float32)       # initHidden()

    seq_out, seq_hid = encoder_rnn_sequence_jit(tokens, hidden0, fused)
    seq_out = jax.block_until_ready(seq_out)
    seq_hid = jax.block_until_ready(seq_hid)

    ref_seq_out, ref_seq_hid = encoder_rnn_reference_sequence(tokens, hidden0, params)
    assert seq_out.shape == (seq_len, 1, 2 * hidden_size)
    assert seq_hid.shape == (2, 1, hidden_size)
    assert jnp.allclose(seq_out, ref_seq_out, atol=1e-3, rtol=1e-3)
    assert jnp.allclose(seq_hid, ref_seq_hid, atol=1e-3, rtol=1e-3)

    print("KERNEL_OK")
</pallas_src>

<mosaic_0001>
module attributes {stable_mosaic.version = 11 : i64} {
  func.func @bigru_seq_kernel(%arg0: i32, %arg1: memref<1xi32, #tpu.memory_space<smem>>, %arg2: memref<50x32xf32, #tpu.memory_space<vmem>>, %arg3: memref<32x384xf32, #tpu.memory_space<vmem>>, %arg4: memref<1x384xf32, #tpu.memory_space<vmem>>, %arg5: memref<128x384xf32, #tpu.memory_space<vmem>>, %arg6: memref<1x384xf32, #tpu.memory_space<vmem>>, %arg7: memref<1x128xf32, #tpu.memory_space<vmem>>, %arg8: memref<1x128xf32, #tpu.memory_space<vmem>>, %arg9: memref<1x32xf32, #tpu.memory_space<vmem>>, %arg10: memref<1x384xf32, #tpu.memory_space<vmem>>, %arg11: memref<1x128xf32, #tpu.memory_space<vmem>>) attributes {dimension_semantics = [#tpu.dimension_semantics<arbitrary>], iteration_bounds = array<i64: 1>, scalar_prefetch = 1 : i64, scratch_operands = 3 : i64, tpu.core_type = #tpu.core_type<tc>, window_params = [{pipeline_mode = #tpu.pipeline_mode<synchronous>, transform_indices = @transform_0, window_bounds = array<i64: 50, 32>}, {pipeline_mode = #tpu.pipeline_mode<synchronous>, transform_indices = @transform_1, window_bounds = array<i64: 32, 384>}, {pipeline_mode = #tpu.pipeline_mode<synchronous>, transform_indices = @transform_2, window_bounds = array<i64: 1, 384>}, {pipeline_mode = #tpu.pipeline_mode<synchronous>, transform_indices = @transform_3, window_bounds = array<i64: 128, 384>}, {pipeline_mode = #tpu.pipeline_mode<synchronous>, transform_indices = @transform_4, window_bounds = array<i64: 1, 384>}, {pipeline_mode = #tpu.pipeline_mode<synchronous>, transform_indices = @transform_5, window_bounds = array<i64: 1, 128>}, {pipeline_mode = #tpu.pipeline_mode<synchronous>, transform_indices = @transform_6, window_bounds = array<i64: 1, 128>}]} {
    %c0_i32 = arith.constant 0 : i32
    %0 = arith.cmpi eq, %arg0, %c0_i32 : i32
    %1 = arith.extui %0 : i1 to i32
    %c0_i32_0 = arith.constant 0 : i32
    %2 = arith.cmpi ne, %1, %c0_i32_0 : i32
    scf.if %2 {
      %c0_13 = arith.constant 0 : index
      %c0_14 = arith.constant 0 : index
      %39 = vector.load %arg7[%c0_13, %c0_14] : memref<1x128xf32, #tpu.memory_space<vmem>>, vector<1x128xf32>
      %c0_15 = arith.constant 0 : index
      %c0_16 = arith.constant 0 : index
      %40 = vector.load %arg11[%c0_15, %c0_16] : memref<1x128xf32, #tpu.memory_space<vmem>>, vector<1x128xf32>
      tpu.vector_store %arg11[%c0_15, %c0_16], %39 {strides = array<i32>} : memref<1x128xf32, #tpu.memory_space<vmem>>, vector<1x128xf32>,
      %c0_17 = arith.constant 0 : index
      %41 = memref.load %arg1[%c0_17] : memref<1xi32, #tpu.memory_space<smem>>
      %42 = arith.index_cast %41 : i32 to index
      %c0_18 = arith.constant 0 : index
      %43 = vector.load %arg2[%42, %c0_18] : memref<50x32xf32, #tpu.memory_space<vmem>>, vector<1x32xf32>
      %c0_19 = arith.constant 0 : index
      %c0_20 = arith.constant 0 : index
      %44 = vector.load %arg9[%c0_19, %c0_20] : memref<1x32xf32, #tpu.memory_space<vmem>>, vector<1x32xf32>
      tpu.vector_store %arg9[%c0_19, %c0_20], %43 {strides = array<i32>} : memref<1x32xf32, #tpu.memory_space<vmem>>, vector<1x32xf32>,
      %c0_21 = arith.constant 0 : index
      %c0_22 = arith.constant 0 : index
      %45 = vector.load %arg9[%c0_21, %c0_22] : memref<1x32xf32, #tpu.memory_space<vmem>>, vector<1x32xf32>
      %c0_23 = arith.constant 0 : index
      %c0_24 = arith.constant 0 : index
      %46 = vector.load %arg3[%c0_23, %c0_24] : memref<32x384xf32, #tpu.memory_space<vmem>>, vector<32x384xf32>
      %cst_25 = arith.constant dense<0.000000e+00> : vector<1x384xf32>
      %47 = tpu.matmul %45, %46, %cst_25 {dimension_numbers = #tpu.dot_dimension_numbers<[1], [0], [0], [1], [0, 0, 1, 1], [], []>} : vector<1x32xf32>, vector<32x384xf32>, vector<1x384xf32> -> vector<1x384xf32>
      %c0_26 = arith.constant 0 : index
      %c0_27 = arith.constant 0 : index
      %48 = vector.load %arg4[%c0_26, %c0_27] : memref<1x384xf32, #tpu.memory_space<vmem>>, vector<1x384xf32>
      %49 = arith.addf %47, %48 : vector<1x384xf32>
      %c0_28 = arith.constant 0 : index
      %c0_29 = arith.constant 0 : index
      %50 = vector.load %arg10[%c0_28, %c0_29] : memref<1x384xf32, #tpu.memory_space<vmem>>, vector<1x384xf32>
      tpu.vector_store %arg10[%c0_28, %c0_29], %49 {strides = array<i32>} : memref<1x384xf32, #tpu.memory_space<vmem>>, vector<1x384xf32>,
    } else {
    }
    %c0 = arith.constant 0 : index
    %c0_1 = arith.constant 0 : index
    %3 = vector.load %arg11[%c0, %c0_1] : memref<1x128xf32, #tpu.memory_space<vmem>>, vector<1x128xf32>
    %4 = arith.index_cast %arg0 : i32 to index
    %c0_2 = arith.constant 0 : index
    %5 = vector.load %arg10[%4, %c0_2] : memref<1x384xf32, #tpu.memory_space<vmem>>, vector<1x384xf32>
    %c0_3 = arith.constant 0 : index
    %c0_4 = arith.constant 0 : index
    %6 = vector.load %arg5[%c0_3, %c0_4] : memref<128x384xf32, #tpu.memory_space<vmem>>, vector<128x384xf32>
    %cst = arith.constant dense<0.000000e+00> : vector<1x384xf32>
    %7 = tpu.matmul %3, %6, %cst {dimension_numbers = #tpu.dot_dimension_numbers<[1], [0], [0], [1], [0, 0, 1, 1], [], []>} : vector<1x128xf32>, vector<128x384xf32>, vector<1x384xf32> -> vector<1x384xf32>
    %c0_5 = arith.constant 0 : index
    %c0_6 = arith.constant 0 : index
    %8 = vector.load %arg6[%c0_5, %c0_6] : memref<1x384xf32, #tpu.memory_space<vmem>>, vector<1x384xf32>
    %9 = arith.addf %7, %8 : vector<1x384xf32>
    %10 = vector.extract_strided_slice %5 {offsets = [0, 0], sizes = [1, 128], strides = [1, 1]} : vector<1x384xf32> to vector<1x128xf32>
    %11 = vector.extract_strided_slice %9 {offsets = [0, 0], sizes = [1, 128], strides = [1, 1]} : vector<1x384xf32> to vector<1x128xf32>
    %12 = arith.addf %10, %11 : vector<1x128xf32>
    %13 = arith.negf %12 : vector<1x128xf32>
    %14 = math.exp %13 : vector<1x128xf32>
    %cst_7 = arith.constant 1.000000e+00 : f32
    %15 = vector.broadcast %cst_7 : f32 to vector<1x128xf32>
    %16 = arith.addf %15, %14 : vector<1x128xf32>
    %17 = arith.divf %15, %16 : vector<1x128xf32>
    %18 = vector.extract_strided_slice %5 {offsets = [0, 128], sizes = [1, 128], strides = [1, 1]} : vector<1x384xf32> to vector<1x128xf32>
    %19 = vector.extract_strided_slice %9 {offsets = [0, 128], sizes = [1, 128], strides = [1, 1]} : vector<1x384xf32> to vector<1x128xf32>
    %20 = arith.addf %18, %19 : vector<1x128xf32>
    %21 = arith.negf %20 : vector<1x128xf32>
    %22 = math.exp %21 : vector<1x128xf32>
    %cst_8 = arith.constant 1.000000e+00 : f32
    %23 = vector.broadcast %cst_8 : f32 to vector<1x128xf32>
    %24 = arith.addf %23, %22 : vector<1x128xf32>
    %25 = arith.divf %23, %24 : vector<1x128xf32>
    %26 = vector.extract_strided_slice %5 {offsets = [0, 256], sizes = [1, 128], strides = [1, 1]} : vector<1x384xf32> to vector<1x128xf32>
    %27 = vector.extract_strided_slice %9 {offsets = [0, 256], sizes = [1, 128], strides = [1, 1]} : vector<1x384xf32> to vector<1x128xf32>
    %28 = arith.mulf %17, %27 : vector<1x128xf32>
    %29 = arith.addf %26, %28 : vector<1x128xf32>
    %30 = math.tanh %29 : vector<1x128xf32>
    %cst_9 = arith.constant 1.000000e+00 : f32
    %31 = vector.broadcast %cst_9 : f32 to vector<1x128xf32>
    %32 = arith.subf %31, %25 : vector<1x128xf32>
    %33 = arith.mulf %32, %30 : vector<1x128xf32>
    %34 = arith.mulf %25, %3 : vector<1x128xf32>
    %35 = arith.addf %33, %34 : vector<1x128xf32>
    %c0_10 = arith.constant 0 : index
    %c0_11 = arith.constant 0 : index
    %36 = vector.load %arg11[%c0_10, %c0_11] : memref<1x128xf32, #tpu.memory_space<vmem>>, vector<1x128xf32>
    tpu.vector_store %arg11[%c0_10, %c0_11], %35 {strides = array<i32>} : memref<1x128xf32, #tpu.memory_space<vmem>>, vector<1x128xf32>,
    %37 = arith.index_cast %arg0 : i32 to index
    %c0_12 = arith.constant 0 : index
    %38 = vector.load %arg8[%37, %c0_12] : memref<1x128xf32, #tpu.memory_space<vmem>>, vector<1x128xf32>
    tpu.vector_store %arg8[%37, %c0_12], %35 {strides = array<i32>} : memref<1x128xf32, #tpu.memory_space<vmem>>, vector<1x128xf32>,
    return
  }
  func.func @transform_0(%arg0: i32, %arg1: memref<1xi32, #tpu.memory_space<smem>>) -> (i32, i32) {
    %c0_i32 = arith.constant 0 : i32
    %c0_i32_0 = arith.constant 0 : i32
    %c0_i32_1 = arith.constant 0 : i32
    return %c0_i32, %c0_i32_0 : i32, i32
  }
  func.func @transform_1(%arg0: i32, %arg1: memref<1xi32, #tpu.memory_space<smem>>) -> (i32, i32) {
    %c0_i32 = arith.constant 0 : i32
    %c0_i32_0 = arith.constant 0 : i32
    %c0_i32_1 = arith.constant 0 : i32
    return %c0_i32, %c0_i32_0 : i32, i32
  }
  func.func @transform_2(%arg0: i32, %arg1: memref<1xi32, #tpu.memory_space<smem>>) -> (i32, i32) {
    %c0_i32 = arith.constant 0 : i32
    %c0_i32_0 = arith.constant 0 : i32
    %c0_i32_1 = arith.constant 0 : i32
    return %c0_i32, %c0_i32_0 : i32, i32
  }
  func.func @transform_3(%arg0: i32, %arg1: memref<1xi32, #tpu.memory_space<smem>>) -> (i32, i32) {
    %c0_i32 = arith.constant 0 : i32
    %c0_i32_0 = arith.constant 0 : i32
    %c0_i32_1 = arith.constant 0 : i32
    return %c0_i32, %c0_i32_0 : i32, i32
  }
  func.func @transform_4(%arg0: i32, %arg1: memref<1xi32, #tpu.memory_space<smem>>) -> (i32, i32) {
    %c0_i32 = arith.constant 0 : i32
    %c0_i32_0 = arith.constant 0 : i32
    %c0_i32_1 = arith.constant 0 : i32
    return %c0_i32, %c0_i32_0 : i32, i32
  }
  func.func @transform_5(%arg0: i32, %arg1: memref<1xi32, #tpu.memory_space<smem>>) -> (i32, i32) {
    %c0_i32 = arith.constant 0 : i32
    %c0_i32_0 = arith.constant 0 : i32
    %c0_i32_1 = arith.constant 0 : i32
    return %c0_i32, %c0_i32_0 : i32, i32
  }
  func.func @transform_6(%arg0: i32, %arg1: memref<1xi32, #tpu.memory_space<smem>>) -> (i32, i32) {
    %c0_i32 = arith.constant 0 : i32
    %c0_i32_0 = arith.constant 0 : i32
    %c0_i32_1 = arith.constant 0 : i32
    return %c0_i32, %c0_i32_0 : i32, i32
  }
}

</mosaic_0001>

<llo_original>
// kernel: squeeze.1
$region0: #{squeeze.1}
  %s0 = inlined_call_operand.vmem [shape: f32[64], index: 0, kind: input, shape index: {}]
  %s1 = inlined_call_operand.hbm [shape: f32[2,1,32], index: 1, kind: output, shape index: {}]
  $region1: #{squeeze.1} parent=0
    #allocation0 [shape = 'u8[1024]{0}', space=vmem, size = 0x400, scoped, tag = 'operand span for operand 1']
    #allocation1 [shape = 's32[1]{0}', space=sflag, size = 0x4, scoped, tag = 'scoped memory for squeeze.1']
    #allocation2 [shape = 'u8[4096]{0}', space=vmem, size = 0x1000, scoped, tag = 'scoped mem for output reshape']
    #allocation3 [shape = 'u8[4096]{0}', space=vmem, size = 0x1000, scoped, tag = 'scoped mem for input reshape']
    %2 = vsyncpa [#allocation1], 0
    %s4 = sshllo.u32 0, 1
    %v5 = vld [vmem:[%s0] sm:%s4]
    %6 = vst [vmem:[#allocation3] sm:%s4] %v5
    %v7 = vld [vmem:[#allocation3] sm:$0x1]
    %vm8 = vcmask 261120
    %9 = vst.msk [vmem:[#allocation2] sm:$0x1] %vm8, %v7
    %v10 = vld [vmem:[#allocation3] sm:$0x1]
    %11 = vrot.lane.b32.xlu0 %v10, 96
    %v12 = vpop.permute.xlu0 %11
    %vm13 = vcmask 261120
    %s14 = scalar_lea.vmem [#allocation2], 1
    %15 = vst.msk [vmem:[%s14] sm:$0x1] %vm13, %v12
    %s17 = sshllo.u32 0, 2
    %v19 = vld [vmem:[#allocation2] sm:%s17]
    %s20 = sshllo.u32 0, 2
    %21 = vst [vmem:[#allocation0] sm:%s20] %v19
    %s23 = ssub.s32 32, 32
    %24 = vsyncadd [#allocation1], %s23
    %s26 = sshll.u32 [#allocation0], 4
    %s27 = int_to_ptr.vmem [resolvable:$true] %s26
    %29 = dma.vmem_to_hbm [thread:$0]  %s27, 32, %s1, [#allocation1]
    %30 = dma.done [#allocation1], 32
    %31 = vsyncpa [#allocation1], 1

// kernel: encoder_rnn_sequence.1
$region0: #{encoder_rnn_sequence.1}
  #allocation0 [shape = 'u32[]', space=smem, size = 0x4, offset = 0x4, fixed_abs, tag = 'smem constant byte address 0x4 - core index']
  #allocation1 [shape = 'u32[144,128]{1,0:T(1,128)}', space=vmem, size = 0x12000, scoped, tag = 'internal scratch']
  #allocation2 [shape = 'f32[1,32]{1,0:T(1,128)}', space=vmem, size = 0x200, scoped, tag = 'scratch operand']
  #allocation3 [shape = 'f32[1,384]{1,0:T(1,128)}', space=vmem, size = 0x600, scoped, tag = 'scratch operand']
  #allocation4 [shape = 'f32[1,128]{1,0:T(1,128)}', space=vmem, size = 0x200, scoped, tag = 'scratch operand']
  #allocation5 [shape = 's32[1]{0}', space=sflag, size = 0x4, scoped, tag = 'scoped memory for encoder_rnn_sequence.1']
  #allocation6 [shape = 's32[1]{0:T(128)S(6)}', space=smem, size = 0x200, scoped, tag = 'prefetched SMEM operand 0']
  %s0 = inlined_call_operand.<no memory space> [shape: s32[1], index: 0, kind: input, shape index: {}]
  %s1 = inlined_call_operand.vmem [shape: f32[50,32], index: 1, kind: input, shape index: {}]
  %s2 = inlined_call_operand.vmem [shape: f32[32,384], index: 2, kind: input, shape index: {}]
  %s3 = inlined_call_operand.vmem [shape: f32[1,384], index: 3, kind: input, shape index: {}]
  %s4 = inlined_call_operand.hbm [shape: f32[128,384], index: 4, kind: input, shape index: {}]
  %s5 = inlined_call_operand.vmem [shape: f32[1,384], index: 5, kind: input, shape index: {}]
  %s6 = inlined_call_operand.vmem [shape: f32[1,128], index: 6, kind: input, shape index: {}]
  %s7 = inlined_call_operand.vmem [shape: f32[1,128], index: 7, kind: output, shape index: {}]
  %s8 = sld [smem:[#allocation0]]
  $region42: #{encoder_rnn_sequence.1} parent=0
    _
  %s10 = ssub.s32 1, %s8
  %s11 = scalar_select 0, %s10, %s8
  %12 = sst [smem:[#allocation6]] %s0
  $region1: #{encoder_rnn_sequence.1} parent=0
    #allocation7 [shape = 'u8[196608]{0}', space=vmem, size = 0x30000, scoped, tag = 'input window, operand 4, single buffered']
    #allocation8 [shape = 's32[1]{0}', space=sflag, size = 0x4, scoped, tag = 'scoped memory for encoder_rnn_sequence.1']
    %13 = vsyncpa [#allocation8], 0
    // Predicated region
    $region2: #{encoder_rnn_sequence.1} parent=1 // pred_check
      _
    $region3: #{encoder_rnn_sequence.1} parent=1 // pred_check_branch
      %15 = sbr.rel (0) target = $region5
    $region4: #{encoder_rnn_sequence.1} parent=1 // pred_region
      _
    $region5: #{encoder_rnn_sequence.1} parent=1 // pred_fallthru
      _
    // Predicated region
    $region6: #{encoder_rnn_sequence.1} parent=1 // pred_check
      _
    $region7: #{encoder_rnn_sequence.1} parent=1 // pred_check_branch
      %17 = sbr.rel (0) target = $region9
    $region8: #{encoder_rnn_sequence.1} parent=1 // pred_region
      _
    $region9: #{encoder_rnn_sequence.1} parent=1 // pred_fallthru
      _
    // Predicated region
    $region10: #{encoder_rnn_sequence.1} parent=1 // pred_check
      _
    $region11: #{encoder_rnn_sequence.1} parent=1 // pred_check_branch
      %19 = sbr.rel (0) target = $region13
    $region12: #{encoder_rnn_sequence.1} parent=1 // pred_region
      _
    $region13: #{encoder_rnn_sequence.1} parent=1 // pred_fallthru
      _
    // Predicated region
    $region14: #{encoder_rnn_sequence.1} parent=1 // pred_check
      _
    $region15: #{encoder_rnn_sequence.1} parent=1 // pred_check_branch
      %21 = sbr.rel (0) target = $region17
    $region16: #{encoder_rnn_sequence.1} parent=1 // pred_region
      %s23 = ssub.s32 6144, 6144
      %24 = vsyncadd [#allocation8], %s23
      %s25 = sshll.u32 [#allocation7], 4
      %s26 = int_to_ptr.vmem [resolvable:$true] %s25
      %31 = dma.hbm_to_vmem [thread:$0]  %s4, 6144, %s26, [#allocation8], 384, 384, 24
    $region17: #{encoder_rnn_sequence.1} parent=1 // pred_fallthru
      _
    // Predicated region
    $region18: #{encoder_rnn_sequence.1} parent=1 // pred_check
      _
    $region19: #{encoder_rnn_sequence.1} parent=1 // pred_check_branch
      %33 = sbr.rel (0) target = $region21
    $region20: #{encoder_rnn_sequence.1} parent=1 // pred_region
      _
    $region21: #{encoder_rnn_sequence.1} parent=1 // pred_fallthru
      _
    // Predicated region
    $region22: #{encoder_rnn_sequence.1} parent=1 // pred_check
      _
    $region23: #{encoder_rnn_sequence.1} parent=1 // pred_check_branch
      %35 = sbr.rel (0) target = $region25
    $region24: #{encoder_rnn_sequence.1} parent=1 // pred_region
      _
    $region25: #{encoder_rnn_sequence.1} parent=1 // pred_fallthru
      _
    // Predicated region
    $region26: #{encoder_rnn_sequence.1} parent=1 // pred_check
      _
    $region27: #{encoder_rnn_sequence.1} parent=1 // pred_check_branch
      %37 = sbr.rel (0) target = $region29
    $region28: #{encoder_rnn_sequence.1} parent=1 // pred_region
      %38 = dma.done [#allocation8], 6144
    $region29: #{encoder_rnn_sequence.1} parent=1 // pred_fallthru
      _
    %p39 = scmp.eq.s32.totalorder 0, 0
    // Predicated region
    $region30: #{encoder_rnn_sequence.1} parent=1 // pred_check
      %p40 = pneg %p39
    $region31: #{encoder_rnn_sequence.1} parent=1 // pred_check_branch
      %42 = sbr.rel (%p40) target = $region33
    $region32: #{encoder_rnn_sequence.1} parent=1 // pred_region
      %v43 = vld [vmem:[%s6] sm:$0x1]
      %44 = vst [vmem:[#allocation4] sm:$0x1] %v43
      %s45 = sld [smem:[#allocation6]]
      %s46 = scalar_lea.vmem %s1, %s45
      %v47 = vld [vmem:[%s46] sm:$0x1]
      %vm48 = vcmask 253952
      %49 = vst.msk [vmem:[#allocation2] sm:$0x1] %vm48, %v47
      %v50 = vld [vmem:[#allocation2] sm:$0x1]
      %v51 = vld [vmem:[%s2] sm:$0xff]
      %v52 = vld [vmem:[%s2 + $0x8] sm:$0xff]
      %v53 = vld [vmem:[%s2 + $0x10] sm:$0xff]
      %v54 = vld [vmem:[%s2 + $0x18] sm:$0xff]
      %v55 = vld [vmem:[%s2 + $0x20] sm:$0xff]
      %v56 = vld [vmem:[%s2 + $0x28] sm:$0xff]
      %v57 = vld [vmem:[%s2 + $0x30] sm:$0xff]
      %v58 = vld [vmem:[%s2 + $0x38] sm:$0xff]
      %v59 = vld [vmem:[%s2 + $0x40] sm:$0xff]
      %v60 = vld [vmem:[%s2 + $0x48] sm:$0xff]
      %v61 = vld [vmem:[%s2 + $0x50] sm:$0xff]
      %v62 = vld [vmem:[%s2 + $0x58] sm:$0xff]
      %v63 = vld [vmem:[%s3] sm:$0x7]
      %v65 = vlaneseq
      %v66 = vshrl.u32 %v65, 7
      %v67 = vsub.s32 0, %v66
      %v68 = vrot.slane %v63, %v67
      %v69 = vlaneseq
      %v70 = vshrl.u32 %v69, 7
      %v71 = vsub.s32 1, %v70
      %v72 = vrot.slane %v63, %v71
      %v73 = vlaneseq
      %v74 = vshrl.u32 %v73, 7
      %v75 = vsub.s32 2, %v74
      %v76 = vrot.slane %v63, %v75
      %vm80 = vcmask 261120
      %v82 = vsel %vm80, %v50, 0
      %84 = vmatprep.subr.mxu0 %v52
      %85 = vmatpush1.msra.mxu0 %v51
      %86 = vmatprep.subr.mxu0 %v55
      %87 = vmatpush1.msra.mxu0 %v54
      %88 = vmatprep.subr.mxu0 %v58
      %89 = vmatpush1.msra.mxu0 %v57
      %90 = vmatprep.subr.mxu0 %v61
      %91 = vmatpush1.msra.mxu0 %v60
      %92 = vmatprep.subr.mxu0 0.0
      %93 = vmatpush1.msra.mxu0 0.0
      %94 = vmatprep.subr.mxu0 0.0
      %95 = vmatpush1.msra.mxu0 0.0
      %96 = vmatprep.subr.mxu0 0.0
      %97 = vmatpush1.msra.mxu0 0.0
      %98 = vmatprep.subr.mxu0 0.0
      %99 = vmatpush1.msra.mxu0 0.0
      %100 = vmatprep.subr.mxu0 0.0
      %101 = vmatpush1.msra.mxu0 0.0
      %102 = vmatprep.subr.mxu0 0.0
      %103 = vmatpush1.msra.mxu0 0.0
      %104 = vmatprep.subr.mxu0 0.0
      %105 = vmatpush1.msra.mxu0 0.0
      %106 = vmatprep.subr.mxu0 0.0
      %107 = vmatpush1.msra.mxu0 0.0
      %108 = vmatprep.subr.mxu0 0.0
      %109 = vmatpush1.msra.mxu0 0.0
      %110 = vmatprep.subr.mxu0 0.0
      %111 = vmatpush1.msra.mxu0 0.0
      %112 = vmatprep.subr.mxu0 0.0
      %113 = vmatpush1.msra.mxu0 0.0
      %114 = vmatprep.subr.mxu0 0.0
      %115 = vmatpush1.msra.mxu0 0.0
      %116 = vmatprep.subr.mxu0 0.0
      %117 = vmatpush1.msra.mxu0 0.0
      %118 = vmatprep.subr.mxu0 0.0
      %119 = vmatpush1.msra.mxu0 0.0
      %120 = vmatprep.subr.mxu0 0.0
      %121 = vmatpush1.msra.mxu0 0.0
      %122 = vmatprep.subr.mxu0 0.0
      %123 = vmatpush1.msra.mxu0 0.0
      %124 = vmatprep.subr.mxu0 0.0
      %125 = vmatpush1.msra.mxu0 0.0
      %126 = vmatprep.subr.mxu0 0.0
      %127 = vmatpush1.msra.mxu0 0.0
      %128 = vmatprep.subr.mxu0 0.0
      %129 = vmatpush1.msra.mxu0 0.0
      %130 = vmatprep.subr.mxu0 0.0
      %131 = vmatpush1.msra.mxu0 0.0
      %132 = vmatprep.subr.mxu0 0.0
      %133 = vmatpush1.msra.mxu0 0.0
      %134 = vmatprep.subr.mxu0 0.0
      %135 = vmatpush1.msra.mxu0 0.0
      %136 = vmatprep.subr.mxu0 0.0
      %137 = vmatpush1.msra.mxu0 0.0
      %138 = vmatprep.subr.mxu0 0.0
      %139 = vmatpush1.msra.mxu0 0.0
      %140 = vmatprep.subr.mxu0 0.0
      %141 = vmatpush1.msra.mxu0 0.0
      %142 = vmatprep.subr.mxu0 0.0
      %143 = vmatpush1.msra.mxu0 0.0
      %144 = vmatprep.subr.mxu0 0.0
      %145 = vmatpush1.msra.mxu0 0.0
      %146 = vmatprep.subr.mxu0 0.0
      %147 = vmatpush1.msra.mxu0 0.0
      %148 = vmatprep.mubr.f32.mxu0 0.0
      %149 = vmatmul.mubr.f32.gmra.mrb[0].mxu0 %v82
      %v150 = vpop.f32.mrb[0].mxu0
      %v151 = vadd.f32 %v68, %v150
      %v152 = vpop.f32.mrb[0].mxu0
      %v153 = vadd.f32 %v72, %v152
      %154 = vdwg.mxu0
      %155 = vmatprep.subr.mxu0 0.0
      %156 = vmatpush1.msra.mxu0 %v53
      %157 = vmatprep.subr.mxu0 0.0
      %158 = vmatpush1.msra.mxu0 %v56
      %159 = vmatprep.subr.mxu0 0.0
      %160 = vmatpush1.msra.mxu0 %v59
      %161 = vmatprep.subr.mxu0 0.0
      %162 = vmatpush1.msra.mxu0 %v62
      %163 = vmatprep.subr.mxu0 0.0
      %164 = vmatpush1.msra.mxu0 0.0
      %165 = vmatprep.subr.mxu0 0.0
      %166 = vmatpush1.msra.mxu0 0.0
      %167 = vmatprep.subr.mxu0 0.0
      %168 = vmatpush1.msra.mxu0 0.0
      %169 = vmatprep.subr.mxu0 0.0
      %170 = vmatpush1.msra.mxu0 0.0
      %171 = vmatprep.subr.mxu0 0.0
      %172 = vmatpush1.msra.mxu0 0.0
      %173 = vmatprep.subr.mxu0 0.0
      %174 = vmatpush1.msra.mxu0 0.0
      %175 = vmatprep.subr.mxu0 0.0
      %176 = vmatpush1.msra.mxu0 0.0
      %177 = vmatprep.subr.mxu0 0.0
      %178 = vmatpush1.msra.mxu0 0.0
      %179 = vmatprep.subr.mxu0 0.0
      %180 = vmatpush1.msra.mxu0 0.0
      %181 = vmatprep.subr.mxu0 0.0
      %182 = vmatpush1.msra.mxu0 0.0
      %183 = vmatprep.subr.mxu0 0.0
      %184 = vmatpush1.msra.mxu0 0.0
      %185 = vmatprep.subr.mxu0 0.0
      %186 = vmatpush1.msra.mxu0 0.0
      %187 = vmatprep.subr.mxu0 0.0
      %188 = vmatpush1.msra.mxu0 0.0
      %189 = vmatprep.subr.mxu0 0.0
      %190 = vmatpush1.msra.mxu0 0.0
      %191 = vmatprep.subr.mxu0 0.0
      %192 = vmatpush1.msra.mxu0 0.0
      %193 = vmatprep.subr.mxu0 0.0
      %194 = vmatpush1.msra.mxu0 0.0
      %195 = vmatprep.subr.mxu0 0.0
      %196 = vmatpush1.msra.mxu0 0.0
      %197 = vmatprep.subr.mxu0 0.0
      %198 = vmatpush1.msra.mxu0 0.0
      %199 = vmatprep.subr.mxu0 0.0
      %200 = vmatpush1.msra.mxu0 0.0
      %201 = vmatprep.subr.mxu0 0.0
      %202 = vmatpush1.msra.mxu0 0.0
      %203 = vmatprep.subr.mxu0 0.0
      %204 = vmatpush1.msra.mxu0 0.0
      %205 = vmatprep.subr.mxu0 0.0
      %206 = vmatpush1.msra.mxu0 0.0
      %207 = vmatprep.subr.mxu0 0.0
      %208 = vmatpush1.msra.mxu0 0.0
      %209 = vmatprep.subr.mxu0 0.0
      %210 = vmatpush1.msra.mxu0 0.0
      %211 = vmatprep.subr.mxu0 0.0
      %212 = vmatpush1.msra.mxu0 0.0
      %213 = vmatprep.subr.mxu0 0.0
      %214 = vmatpush1.msra.mxu0 0.0
      %215 = vmatprep.subr.mxu0 0.0
      %216 = vmatpush1.msra.mxu0 0.0
      %217 = vmatprep.subr.mxu0 0.0
      %218 = vmatpush1.msra.mxu0 0.0
      %219 = vmatprep.mubr.f32.mxu0 0.0
      %220 = vmatmul.mubr.f32.gmra.mrb[0].mxu0 %v82
      %v221 = vpop.f32.mrb[0].mxu0
      %v222 = vadd.f32 %v76, %v221
      %v223 = vpop.f32.mrb[0].mxu0
      %224 = vdwg.mxu0
      %v228 = vcombine.low %v151, %v153
      %v230 = vunpack.c.l.s4 1966171168
      %v231 = vunpack.c.0.s8 %v230
      %v232 = vlaneseq
      %v233 = vshrl.u32 %v232, 7
      %v234 = vsub.s32 %v231, %v233
      %v235 = vrot.slane %v228, %v234
      %v237 = vunpack.c.l.s4 1966171168
      %v238 = vunpack.c.0.s8 %v237
      %v239 = vlaneseq
      %v240 = vshrl.u32 %v239, 7
      %v241 = vsub.s32 %v238, %v240
      %v242 = vrot.slane %v222, %v241
      %v243 = vcombine.low %v235, %v242
      %v245 = vunpack.c.l.s4 1966171168
      %v246 = vunpack.c.0.s8 %v245
      %v247 = vlaneseq
      %v248 = vshrl.u32 %v247, 7
      %v249 = vsub.s32 %v246, %v248
      %v250 = vrot.slane %v243, %v249
      %v252 = vlaneseq
      %vm253 = vcmp.ge.s32.totalorder %v252, 0
      %vm254 = vcmp.lt.s32.totalorder %v252, 384
      %vm255 = vmand %vm253, %vm254
      %256 = vst.msk [vmem:[#allocation3] sm:$0x7] %vm255, %v250
    $region33: #{encoder_rnn_sequence.1} parent=1 // pred_fallthru
      _
    %v257 = vld [vmem:[#allocation4] sm:$0x1]
    %s258 = smul.u32 0, 3
    %s259 = scalar_lea.vmem [#allocation3], %s258
    %v260 = vld [vmem:[%s259] sm:$0x7]
    %v261 = vld [vmem:[#allocation7] sm:$0xff]
    %v262 = vld [vmem:[#allocation7 + $0x8] sm:$0xff]
    %v263 = vld [vmem:[#allocation7 + $0x10] sm:$0xff]
    %v264 = vld [vmem:[#allocation7 + $0x18] sm:$0xff]
    %v265 = vld [vmem:[#allocation7 + $0x20] sm:$0xff]
    %v266 = vld [vmem:[#allocation7 + $0x28] sm:$0xff]
    %v267 = vld [vmem:[#allocation7 + $0x30] sm:$0xff]
    %v268 = vld [vmem:[#allocation7 + $0x38] sm:$0xff]
    %v269 = vld [vmem:[#allocation7 + $0x40] sm:$0xff]
    %v270 = vld [vmem:[#allocation7 + $0x48] sm:$0xff]
    %v271 = vld [vmem:[#allocation7 + $0x50] sm:$0xff]
    %v272 = vld [vmem:[#allocation7 + $0x58] sm:$0xff]
    %v273 = vld [vmem:[#allocation7 + $0x60] sm:$0xff]
    %v274 = vld [vmem:[#allocation7 + $0x68] sm:$0xff]
    %v275 = vld [vmem:[#allocation7 + $0x70] sm:$0xff]
    %v276 = vld [vmem:[#allocation7 + $0x78] sm:$0xff]
    %v277 = vld [vmem:[#allocation7 + $0x80] sm:$0xff]
    %v278 = vld [vmem:[#allocation7 + $0x88] sm:$0xff]
    %v279 = vld [vmem:[#allocation7 + $0x90] sm:$0xff]
    %v280 = vld [vmem:[#allocation7 + $0x98] sm:$0xff]
    %v281 = vld [vmem:[#allocation7 + $0xa0] sm:$0xff]
    %v282 = vld [vmem:[#allocation7 + $0xa8] sm:$0xff]
    %v283 = vld [vmem:[#allocation7 + $0xb0] sm:$0xff]
    %v284 = vld [vmem:[#allocation7 + $0xb8] sm:$0xff]
    %v285 = vld [vmem:[#allocation7 + $0xc0] sm:$0xff]
    %v286 = vld [vmem:[#allocation7 + $0xc8] sm:$0xff]
    %v287 = vld [vmem:[#allocation7 + $0xd0] sm:$0xff]
    %v288 = vld [vmem:[#allocation7 + $0xd8] sm:$0xff]
    %v289 = vld [vmem:[#allocation7 + $0xe0] sm:$0xff]
    %v290 = vld [vmem:[#allocation7 + $0xe8] sm:$0xff]
    %v291 = vld [vmem:[#allocation7 + $0xf0] sm:$0xff]
    %v292 = vld [vmem:[#allocation7 + $0xf8] sm:$0xff]
    %v293 = vld [vmem:[#allocation7 + $0x100] sm:$0xff]
    %v294 = vld [vmem:[#allocation7 + $0x108] sm:$0xff]
    %v295 = vld [vmem:[#allocation7 + $0x110] sm:$0xff]
    %v296 = vld [vmem:[#allocation7 + $0x118] sm:$0xff]
    %v297 = vld [vmem:[#allocation7 + $0x120] sm:$0xff]
    %v298 = vld [vmem:[#allocation7 + $0x128] sm:$0xff]
    %v299 = vld [vmem:[#allocation7 + $0x130] sm:$0xff]
    %v300 = vld [vmem:[#allocation7 + $0x138] sm:$0xff]
    %v301 = vld [vmem:[#allocation7 + $0x140] sm:$0xff]
    %v302 = vld [vmem:[#allocation7 + $0x148] sm:$0xff]
    %v303 = vld [vmem:[#allocation7 + $0x150] sm:$0xff]
    %v304 = vld [vmem:[#allocation7 + $0x158] sm:$0xff]
    %v305 = vld [vmem:[#allocation7 + $0x160] sm:$0xff]
    %v306 = vld [vmem:[#allocation7 + $0x168] sm:$0xff]
    %v307 = vld [vmem:[#allocation7 + $0x170] sm:$0xff]
    %v308 = vld [vmem:[#allocation7 + $0x178] sm:$0xff]
    %v309 = vld [vmem:[%s5] sm:$0x7]
    %v311 = vlaneseq
    %v312 = vshrl.u32 %v311, 7
    %v313 = vsub.s32 0, %v312
    %v314 = vrot.slane %v309, %v313
    %v315 = vlaneseq
    %v316 = vshrl.u32 %v315, 7
    %v317 = vsub.s32 1, %v316
    %v318 = vrot.slane %v309, %v317
    %v319 = vlaneseq
    %v320 = vshrl.u32 %v319, 7
    %v321 = vsub.s32 2, %v320
    %v322 = vrot.slane %v309, %v321
    %326 = vmatprep.subr.mxu0 %v262
    %327 = vmatpush1.msra.mxu0 %v261
    %328 = vmatprep.subr.mxu0 %v265
    %329 = vmatpush1.msra.mxu0 %v264
    %330 = vmatprep.subr.mxu0 %v268
    %331 = vmatpush1.msra.mxu0 %v267
    %332 = vmatprep.subr.mxu0 %v271
    %333 = vmatpush1.msra.mxu0 %v270
    %334 = vmatprep.subr.mxu0 %v274
    %335 = vmatpush1.msra.mxu0 %v273
    %336 = vmatprep.subr.mxu0 %v277
    %337 = vmatpush1.msra.mxu0 %v276
    %338 = vmatprep.subr.mxu0 %v280
    %339 = vmatpush1.msra.mxu0 %v279
    %340 = vmatprep.subr.mxu0 %v283
    %341 = vmatpush1.msra.mxu0 %v282
    %342 = vmatprep.subr.mxu0 %v286
    %343 = vmatpush1.msra.mxu0 %v285
    %344 = vmatprep.subr.mxu0 %v289
    %345 = vmatpush1.msra.mxu0 %v288
    %346 = vmatprep.subr.mxu0 %v292
    %347 = vmatpush1.msra.mxu0 %v291
    %348 = vmatprep.subr.mxu0 %v295
    %349 = vmatpush1.msra.mxu0 %v294
    %350 = vmatprep.subr.mxu0 %v298
    %351 = vmatpush1.msra.mxu0 %v297
    %352 = vmatprep.subr.mxu0 %v301
    %353 = vmatpush1.msra.mxu0 %v300
    %354 = vmatprep.subr.mxu0 %v304
    %355 = vmatpush1.msra.mxu0 %v303
    %356 = vmatprep.subr.mxu0 %v307
    %357 = vmatpush1.msra.mxu0 %v306
    %358 = vmatprep.subr.mxu0 0.0
    %359 = vmatpush1.msra.mxu0 0.0
    %360 = vmatprep.subr.mxu0 0.0
    %361 = vmatpush1.msra.mxu0 0.0
    %362 = vmatprep.subr.mxu0 0.0
    %363 = vmatpush1.msra.mxu0 0.0
    %364 = vmatprep.subr.mxu0 0.0
    %365 = vmatpush1.msra.mxu0 0.0
    %366 = vmatprep.subr.mxu0 0.0
    %367 = vmatpush1.msra.mxu0 0.0
    %368 = vmatprep.subr.mxu0 0.0
    %369 = vmatpush1.msra.mxu0 0.0
    %370 = vmatprep.subr.mxu0 0.0
    %371 = vmatpush1.msra.mxu0 0.0
    %372 = vmatprep.subr.mxu0 0.0
    %373 = vmatpush1.msra.mxu0 0.0
    %374 = vmatprep.subr.mxu0 0.0
    %375 = vmatpush1.msra.mxu0 0.0
    %376 = vmatprep.subr.mxu0 0.0
    %377 = vmatpush1.msra.mxu0 0.0
    %378 = vmatprep.subr.mxu0 0.0
    %379 = vmatpush1.msra.mxu0 0.0
    %380 = vmatprep.subr.mxu0 0.0
    %381 = vmatpush1.msra.mxu0 0.0
    %382 = vmatprep.subr.mxu0 0.0
    %383 = vmatpush1.msra.mxu0 0.0
    %384 = vmatprep.subr.mxu0 0.0
    %385 = vmatpush1.msra.mxu0 0.0
    %386 = vmatprep.subr.mxu0 0.0
    %387 = vmatpush1.msra.mxu0 0.0
    %388 = vmatprep.subr.mxu0 0.0
    %389 = vmatpush1.msra.mxu0 0.0
    %390 = vmatprep.mubr.f32.mxu0 0.0
    %391 = vmatmul.mubr.f32.gmra.mrb[0].mxu0 %v257
    %v392 = vpop.f32.mrb[0].mxu0
    %v393 = vadd.f32 %v314, %v392
    %v394 = vpop.f32.mrb[0].mxu0
    %v395 = vadd.f32 %v318, %v394
    %396 = vdwg.mxu0
    %397 = vmatprep.subr.mxu0 0.0
    %398 = vmatpush1.msra.mxu0 %v263
    %399 = vmatprep.subr.mxu0 0.0
    %400 = vmatpush1.msra.mxu0 %v266
    %401 = vmatprep.subr.mxu0 0.0
    %402 = vmatpush1.msra.mxu0 %v269
    %403 = vmatprep.subr.mxu0 0.0
    %404 = vmatpush1.msra.mxu0 %v272
    %405 = vmatprep.subr.mxu0 0.0
    %406 = vmatpush1.msra.mxu0 %v275
    %407 = vmatprep.subr.mxu0 0.0
    %408 = vmatpush1.msra.mxu0 %v278
    %409 = vmatprep.subr.mxu0 0.0
    %410 = vmatpush1.msra.mxu0 %v281
    %411 = vmatprep.subr.mxu0 0.0
    %412 = vmatpush1.msra.mxu0 %v284
    %413 = vmatprep.subr.mxu0 0.0
    %414 = vmatpush1.msra.mxu0 %v287
    %415 = vmatprep.subr.mxu0 0.0
    %416 = vmatpush1.msra.mxu0 %v290
    %417 = vmatprep.subr.mxu0 0.0
    %418 = vmatpush1.msra.mxu0 %v293
    %419 = vmatprep.subr.mxu0 0.0
    %420 = vmatpush1.msra.mxu0 %v296
    %421 = vmatprep.subr.mxu0 0.0
    %422 = vmatpush1.msra.mxu0 %v299
    %423 = vmatprep.subr.mxu0 0.0
    %424 = vmatpush1.msra.mxu0 %v302
    %425 = vmatprep.subr.mxu0 0.0
    %426 = vmatpush1.msra.mxu0 %v305
    %427 = vmatprep.subr.mxu0 0.0
    %428 = vmatpush1.msra.mxu0 %v308
    %429 = vmatprep.subr.mxu0 0.0
    %430 = vmatpush1.msra.mxu0 0.0
    %431 = vmatprep.subr.mxu0 0.0
    %432 = vmatpush1.msra.mxu0 0.0
    %433 = vmatprep.subr.mxu0 0.0
    %434 = vmatpush1.msra.mxu0 0.0
    %435 = vmatprep.subr.mxu0 0.0
    %436 = vmatpush1.msra.mxu0 0.0
    %437 = vmatprep.subr.mxu0 0.0
    %438 = vmatpush1.msra.mxu0 0.0
    %439 = vmatprep.subr.mxu0 0.0
    %440 = vmatpush1.msra.mxu0 0.0
    %441 = vmatprep.subr.mxu0 0.0
    %442 = vmatpush1.msra.mxu0 0.0
    %443 = vmatprep.subr.mxu0 0.0
    %444 = vmatpush1.msra.mxu0 0.0
    %445 = vmatprep.subr.mxu0 0.0
    %446 = vmatpush1.msra.mxu0 0.0
    %447 = vmatprep.subr.mxu0 0.0
    %448 = vmatpush1.msra.mxu0 0.0
    %449 = vmatprep.subr.mxu0 0.0
    %450 = vmatpush1.msra.mxu0 0.0
    %451 = vmatprep.subr.mxu0 0.0
    %452 = vmatpush1.msra.mxu0 0.0
    %453 = vmatprep.subr.mxu0 0.0
    %454 = vmatpush1.msra.mxu0 0.0
    %455 = vmatprep.subr.mxu0 0.0
    %456 = vmatpush1.msra.mxu0 0.0
    %457 = vmatprep.subr.mxu0 0.0
    %458 = vmatpush1.msra.mxu0 0.0
    %459 = vmatprep.subr.mxu0 0.0
    %460 = vmatpush1.msra.mxu0 0.0
    %461 = vmatprep.mubr.f32.mxu0 0.0
    %462 = vmatmul.mubr.f32.gmra.mrb[0].mxu0 %v257
    %v463 = vpop.f32.mrb[0].mxu0
    %v464 = vadd.f32 %v322, %v463
    %v465 = vpop.f32.mrb[0].mxu0
    %466 = vdwg.mxu0
    %v467 = vadd.f32 %v260, %v393
    %v468 = vxor.u32 %v467, 2147483648
    %v469 = vmul.f32 %v468, 1.442695
    %v470 = vpow.pop %v469
    %v471 = vadd.f32 %v470, 1.0
    %v472 = vrcp.pop %v471
    %v473 = vmul.f32 1.0, %v472
    %v475 = vrot.slane %v260, 1
    %v477 = vadd.f32 %v475, %v395
    %v478 = vxor.u32 %v477, 2147483648
    %v479 = vmul.f32 %v478, 1.442695
    %v480 = vpow.pop %v479
    %v481 = vadd.f32 %v480, 1.0
    %v482 = vrcp.pop %v481
    %v483 = vmul.f32 1.0, %v482
    %v484 = vmul.f32 %v473, %v464
    %v485 = vrot.slane %v260, 2
    %v487 = vadd.f32 %v485, %v484
    %v488 = vtanh.pop %v487
    %v489 = vsub.f32 1.0, %v483
    %v490 = vmul.f32 %v489, %v488
    %v491 = vmul.f32 %v483, %v257
    %v492 = vadd.f32 %v490, %v491
    %493 = vst [vmem:[#allocation4] sm:$0x1] %v492
    %494 = vst [vmem:[%s7] sm:$0x1] %v492
    // Predicated region
    $region34: #{encoder_rnn_sequence.1} parent=1 // pred_check
      _
    $region35: #{encoder_rnn_sequence.1} parent=1 // pred_check_branch
      %496 = sbr.rel (0) target = $region37
    $region36: #{encoder_rnn_sequence.1} parent=1 // pred_region
      _
    $region37: #{encoder_rnn_sequence.1} parent=1 // pred_fallthru
      _
    // Predicated region
    $region38: #{encoder_rnn_sequence.1} parent=1 // pred_check
      _
    $region39: #{encoder_rnn_sequence.1} parent=1 // pred_check_branch
      %498 = sbr.rel (0) target = $region41
    $region40: #{encoder_rnn_sequence.1} parent=1 // pred_region
      _
    $region41: #{encoder_rnn_sequence.1} parent=1 // pred_fallthru
      _
    %499 = vsyncpa [#allocation8], 1

</llo_original>
